<compile_context>
chip_gen: v7x
topology: tpu7x:2x2x1
jax: 0.10.0
libtpu: 0.0.40
codegen_flags: <defaults>
</compile_context>

<pallas_src>
import jax
import jax.numpy as jnp
from jax import lax
from jax.experimental import pallas as pl
from jax.experimental.pallas import tpu as pltpu


def _round_up(x, m):
    return ((x + m - 1) // m) * m


def _choose_tb(batch):
    """Lane-aligned batch tile; big tiles, but >=2 grid steps when possible."""
    bp = _round_up(batch, 128)
    tb = min(bp, 2048)                 # amortize ~0.35us/step, fill MXU N dim
    if bp // tb < 2 and bp >= 256:     # give v7x megacore 2 tiles to split
        tb = _round_up(bp // 2, 128)
    return tb


# ----------------------------- Pallas kernel --------------------------------
def _fusion_kernel(idx_ref, ta_ref, tb_ref, b1_ref, w2_ref, b2_ref, w3_ref,
                   b3_ref, o_ref):
    """Fused gather + MLP head in transposed (features, batch) layout.

    gather(TA,TB via one-hot MXU) -> +b1 -> Softmax -> [Dropout=id] ->
    (Linear+BN folded) -> Softmax folded into (Linear(d/2->1)+BN) -> Sigmoid
    """
    n_nodes = ta_ref.shape[1]
    blk = idx_ref.shape[1]

    idx = idx_ref[...]                                           # (2, tb) int32
    # One-hot gather of table columns: lands directly in (d, tb) layout.
    # NOTE: for very large node tables, replace this with a scalar-prefetch /
    # DMA gather to avoid the (num_nodes, tb) one-hot intermediate.
    node_iota = lax.broadcasted_iota(jnp.int32, (n_nodes, blk), 0)
    oh_a = (node_iota == idx[0:1, :]).astype(ta_ref.dtype)       # (N, tb)
    oh_b = (node_iota == idx[1:2, :]).astype(ta_ref.dtype)       # (N, tb)

    # Layer 1: folded Linear(2d->d)+BN realized as TA[:,drugA] + TB[:,drugB].
    h = jnp.dot(ta_ref[...], oh_a, preferred_element_type=jnp.float32)
    h = h + jnp.dot(tb_ref[...], oh_b, preferred_element_type=jnp.float32)
    h = h + b1_ref[...]                                          # (d, tb) f32

    # Softmax(dim=1) in the original layout == softmax over the sublane
    # (feature) axis here; batch stays dense on the 128-lane axis.
    m1 = jnp.max(h, axis=0, keepdims=True)
    e1 = jnp.exp(h - m1)
    h = e1 * pl.reciprocal(jnp.sum(e1, axis=0, keepdims=True), approx=True)
    # Dropout(p): identity in eval mode.

    # Layer 2: folded Linear(d -> d/2) + BN (bf16 MXU, f32 accumulate).
    h2 = jnp.dot(w2_ref[...], h.astype(w2_ref.dtype),
                 preferred_element_type=jnp.float32) + b2_ref[...]

    # Softmax #2 folded into layer-3 reduction:
    #   sigmoid( softmax(h2) . w3 + b3 ) == sigmoid( sum(e*w3)/sum(e) + b3 )
    m2 = jnp.max(h2, axis=0, keepdims=True)
    e2 = jnp.exp(h2 - m2)
    num = jnp.sum(e2 * w3_ref[...], axis=0, keepdims=True)       # (1, tb)
    den = jnp.sum(e2, axis=0, keepdims=True)
    z = num * pl.reciprocal(den, approx=True) + b3_ref[0]        # b3: SMEM scalar
    o_ref[...] = jax.nn.sigmoid(z).astype(o_ref.dtype)           # (1, tb)


# ------------------------------ kernel wrapper -------------------------------
def fusion_mlp_from_tables(idx, ta, tb_tab, b1, w2, b2, w3, b3, *, tb=None):
    """idx: (2, B) int32 drug indices; ta/tb_tab: (d, num_nodes) layer-1 tables."""
    d, n_nodes = ta.shape
    _, batch = idx.shape
    d_half = w2.shape[0]

    if tb is None:
        tb = _choose_tb(batch)
    assert tb % 128 == 0, "batch tile must be lane-aligned (multiple of 128)"

    bp = _round_up(batch, tb)
    if bp != batch:
        # Only the tiny int32 index array is padded (8 B/sample) — the big
        # float tensor from the old gather/concat/transpose no longer exists.
        idx = jnp.pad(idx, ((0, 0), (0, bp - batch)))

    rep = lambda arr: pl.BlockSpec(arr.shape, lambda i: (0, 0))  # resident refs

    # Rough VMEM footprint; only raise the scoped-VMEM limit when needed
    # (v5e default is 16 MiB even though physical VMEM is 128 MiB).
    isz = jnp.dtype(ta.dtype).itemsize
    est = (2 * (2 * tb * 4 + tb * 4)                 # double-buffered idx/out
           + 2 * d * n_nodes * isz + d_half * d * isz
           + (d + 2 * d_half + 1) * 4
           + n_nodes * tb * (4 + 2 * isz)            # iota + two one-hots
           + 6 * d * tb * 4)                         # activation headroom
    vmem_limit = None if est < (12 << 20) else min(2 * est, 64 << 20)

    grid_spec = pl.GridSpec(
        grid=(bp // tb,),
        in_specs=[
            pl.BlockSpec((2, tb), lambda i: (0, i)),             # indices tile
            rep(ta), rep(tb_tab), rep(b1),
            rep(w2), rep(b2), rep(w3),
            pl.BlockSpec(memory_space=pltpu.MemorySpace.SMEM),   # b3 scalar
        ],
        out_specs=pl.BlockSpec((1, tb), lambda i: (0, i)),       # lane-dense out
    )

    out_t = pl.pallas_call(
        _fusion_kernel,
        out_shape=jax.ShapeDtypeStruct((1, bp), jnp.float32),
        grid_spec=grid_spec,
        compiler_params=pltpu.CompilerParams(
            dimension_semantics=("parallel",),
            vmem_limit_bytes=vmem_limit),
    )(idx, ta, tb_tab, b1, w2, b2, w3, b3)

    return out_t[0, :batch][:, None]                             # (B, 1)


# --------------------------- parameter construction --------------------------
def make_fusion_raw_params(key, dimension):
    """Raw per-layer params mirroring the PyTorch __init__ (eval-mode BN)."""
    d = dimension
    d_half = d // 2
    keys = jax.random.split(key, 3)

    def layer(k, fan_in, fan_out):
        # nn.init.xavier_uniform_: U(-a, a), a = sqrt(6 / (fan_in + fan_out)).
        bound = (6.0 / (fan_in + fan_out)) ** 0.5
        w = jax.random.uniform(k, (fan_out, fan_in), jnp.float32, -bound, bound)
        return dict(
            w=w,
            b=jnp.zeros((fan_out,), jnp.float32),
            gamma=jnp.ones((fan_out,), jnp.float32),
            beta=jnp.zeros((fan_out,), jnp.float32),
            mean=jnp.zeros((fan_out,), jnp.float32),
            var=jnp.ones((fan_out,), jnp.float32),
        )

    return (layer(keys[0], 2 * d, d),
            layer(keys[1], d, d_half),
            layer(keys[2], d_half, 1))


def fold_params(raw, *, eps=1e-5):
    """Fold eval-mode BatchNorm + Linear bias into the weights (all f32).

    Returns: w1 (d, 2d), b1 (d, 1), w2 (d/2, d), b2 (d/2, 1),
             w3 (d/2, 1) column, b3 (1,) scalar.
    For a trained model, re-run with the trained running stats.
    """
    def fold(p):
        s = p["gamma"] / jnp.sqrt(p["var"] + eps)
        w = p["w"] * s[:, None]
        b = (p["b"] - p["mean"]) * s + p["beta"]
        return w.astype(jnp.float32), b.astype(jnp.float32)

    w1, b1 = fold(raw[0])
    w2, b2 = fold(raw[1])
    w3, b3 = fold(raw[2])
    return (w1, b1[:, None], w2, b2[:, None], jnp.transpose(w3), b3)


# ------------------------------- full forward --------------------------------
def fusion_layer_forward(embeddings, X, params, gnn_layers, *, tb=None,
                         operand_dtype=jnp.bfloat16):
    """Mirrors FusionLayer.forward for GNNlayers in {1, 2, 3}.

    operand_dtype: dtype of the DMA'd MXU operands (tables, W2, activations
    feeding matmuls).  Use jnp.float32 for strict numerical parity.
    """
    if gnn_layers == 1:
        Embedding = embeddings[0]
    elif gnn_layers in (2, 3):
        Embedding = jnp.concatenate(list(embeddings[:gnn_layers]), axis=1)
    else:
        # TODO(synk): GNNlayers==4 attention path depends on external
        # Tool.net_args config and a hardcoded node count (4283); not implemented.
        raise NotImplementedError("GNNlayers == 4 attention path not implemented")

    w1, b1, w2, b2, w3, b3 = params
    d = w1.shape[0]

    # Algebraic fold of layer 1 into tiny per-node tables (once per forward):
    #   layer1(x) = W1[:, :d] @ Emb[drugA]^T + W1[:, d:] @ Emb[drugB]^T + b1
    emb_t = Embedding.astype(jnp.float32).T                      # (d, N)
    ta = jnp.dot(w1[:, :d], emb_t).astype(operand_dtype)         # (d, N)
    tb_tab = jnp.dot(w1[:, d:], emb_t).astype(operand_dtype)     # (d, N)

    idx = X.astype(jnp.int32).T                                  # (2, B)  "X.long()"
    return fusion_mlp_from_tables(idx, ta, tb_tab, b1,
                                  w2.astype(operand_dtype), b2, w3, b3, tb=tb)


# --------------------------- pure-JAX reference -------------------------------
def _reference(final_embedding, raw, eps=1e-5):
    h = final_embedding
    for i, p in enumerate(raw):
        h = h @ p["w"].T + p["b"]
        h = (h - p["mean"]) / jnp.sqrt(p["var"] + eps) * p["gamma"] + p["beta"]
        if i < 2:
            h = jax.nn.softmax(h, axis=1)
    return jax.nn.sigmoid(h)


if __name__ == "__main__":
    dimension = 32          # Embedding feature size (Linear expects 2*dimension)
    gnn_layers = 2          # each per-layer embedding contributes dimension/2 cols
    num_nodes = 64          # number of drugs/entities
    batch = 500             # not a multiple of 128 -> exercises cheap index padding

    key = jax.random.PRNGKey(0)
    k_e1, k_e2, k_x, k_p = jax.random.split(key, 4)

    per_layer = dimension // gnn_layers
    embedding1 = jax.random.normal(k_e1, (num_nodes, per_layer), jnp.float32)
    embedding2 = jax.random.normal(k_e2, (num_nodes, per_layer), jnp.float32)
    X = jax.random.randint(k_x, (batch, 2), 0, num_nodes, jnp.int32)

    raw_params = make_fusion_raw_params(k_p, dimension)
    params = fold_params(raw_params)

    fwd = jax.jit(lambda e, x, p: fusion_layer_forward(e, x, p, gnn_layers))
    out = fwd((embedding1, embedding2), X, params)
    out = jax.block_until_ready(out)

    # correctness check against the unfolded pure-JAX f32 reference
    Embedding = jnp.concatenate([embedding1, embedding2], axis=1)
    final_embedding = jnp.concatenate(
        [Embedding[X[:, 0]], Embedding[X[:, 1]]], axis=1).astype(jnp.float32)
    ref = _reference(final_embedding, raw_params)

    assert out.shape == (batch, 1)
    err = float(jnp.max(jnp.abs(out - ref)))
    # bf16 MXU operands + approx reciprocals in the softmax denominators
    # -> looser-than-f32 tolerance (use operand_dtype=f32 for tight parity).
    assert jnp.allclose(out, ref, atol=1e-2, rtol=1e-2), f"max abs err {err}"

    print("KERNEL_OK")
</pallas_src>

<mosaic_0001>
module attributes {stable_mosaic.version = 11 : i64} {
  func.func @_fusion_kernel(%arg0: i32, %arg1: memref<2x256xi32, #tpu.memory_space<vmem>>, %arg2: memref<32x64xbf16, #tpu.memory_space<vmem>>, %arg3: memref<32x64xbf16, #tpu.memory_space<vmem>>, %arg4: memref<32x1xf32, #tpu.memory_space<vmem>>, %arg5: memref<16x32xbf16, #tpu.memory_space<vmem>>, %arg6: memref<16x1xf32, #tpu.memory_space<vmem>>, %arg7: memref<16x1xf32, #tpu.memory_space<vmem>>, %arg8: memref<1xf32, #tpu.memory_space<smem>>, %arg9: memref<1x256xf32, #tpu.memory_space<vmem>>) attributes {dimension_semantics = [#tpu.dimension_semantics<parallel>], iteration_bounds = array<i64: 2>, scalar_prefetch = 0 : i64, scratch_operands = 0 : i64, tpu.core_type = #tpu.core_type<tc>, window_params = [{transform_indices = @transform_0, window_bounds = array<i64: 2, 256>}, {pipeline_mode = #tpu.pipeline_mode<synchronous>, transform_indices = @transform_1, window_bounds = array<i64: 32, 64>}, {pipeline_mode = #tpu.pipeline_mode<synchronous>, transform_indices = @transform_2, window_bounds = array<i64: 32, 64>}, {pipeline_mode = #tpu.pipeline_mode<synchronous>, transform_indices = @transform_3, window_bounds = array<i64: 32, 1>}, {pipeline_mode = #tpu.pipeline_mode<synchronous>, transform_indices = @transform_4, window_bounds = array<i64: 16, 32>}, {pipeline_mode = #tpu.pipeline_mode<synchronous>, transform_indices = @transform_5, window_bounds = array<i64: 16, 1>}, {pipeline_mode = #tpu.pipeline_mode<synchronous>, transform_indices = @transform_6, window_bounds = array<i64: 16, 1>}, {transform_indices = @transform_7, window_bounds = array<i64: 1>}, {transform_indices = @transform_8, window_bounds = array<i64: 1, 256>}]} {
    %c0 = arith.constant 0 : index
    %c0_0 = arith.constant 0 : index
    %0 = vector.load %arg1[%c0, %c0_0] : memref<2x256xi32, #tpu.memory_space<vmem>>, vector<2x256xi32>
    %1 = tpu.iota {dimensions = array<i32: 0>} : vector<64x256xi32>
    %2 = vector.extract_strided_slice %0 {offsets = [0, 0], sizes = [1, 256], strides = [1, 1]} : vector<2x256xi32> to vector<1x256xi32>
    %3 = vector.broadcast %2 : vector<1x256xi32> to vector<64x256xi32>
    %4 = arith.cmpi eq, %1, %3 : vector<64x256xi32>
    %5 = arith.extui %4 : vector<64x256xi1> to vector<64x256xi32>
    %6 = arith.sitofp %5 : vector<64x256xi32> to vector<64x256xf32>
    %7 = arith.truncf %6 : vector<64x256xf32> to vector<64x256xbf16>
    %8 = vector.extract_strided_slice %0 {offsets = [1, 0], sizes = [1, 256], strides = [1, 1]} : vector<2x256xi32> to vector<1x256xi32>
    %9 = vector.broadcast %8 : vector<1x256xi32> to vector<64x256xi32>
    %10 = arith.cmpi eq, %1, %9 : vector<64x256xi32>
    %11 = arith.extui %10 : vector<64x256xi1> to vector<64x256xi32>
    %12 = arith.sitofp %11 : vector<64x256xi32> to vector<64x256xf32>
    %13 = arith.truncf %12 : vector<64x256xf32> to vector<64x256xbf16>
    %c0_1 = arith.constant 0 : index
    %c0_2 = arith.constant 0 : index
    %14 = vector.load %arg2[%c0_1, %c0_2] : memref<32x64xbf16, #tpu.memory_space<vmem>>, vector<32x64xbf16>
    %cst = arith.constant dense<0.000000e+00> : vector<32x256xf32>
    %15 = tpu.matmul %14, %7, %cst {dimension_numbers = #tpu.dot_dimension_numbers<[1], [0], [0], [1], [0, 0, 1, 1], [], []>} : vector<32x64xbf16>, vector<64x256xbf16>, vector<32x256xf32> -> vector<32x256xf32>
    %c0_3 = arith.constant 0 : index
    %c0_4 = arith.constant 0 : index
    %16 = vector.load %arg3[%c0_3, %c0_4] : memref<32x64xbf16, #tpu.memory_space<vmem>>, vector<32x64xbf16>
    %cst_5 = arith.constant dense<0.000000e+00> : vector<32x256xf32>
    %17 = tpu.matmul %16, %13, %cst_5 {dimension_numbers = #tpu.dot_dimension_numbers<[1], [0], [0], [1], [0, 0, 1, 1], [], []>} : vector<32x64xbf16>, vector<64x256xbf16>, vector<32x256xf32> -> vector<32x256xf32>
    %18 = arith.addf %15, %17 : vector<32x256xf32>
    %c0_6 = arith.constant 0 : index
    %c0_7 = arith.constant 0 : index
    %19 = vector.load %arg4[%c0_6, %c0_7] : memref<32x1xf32, #tpu.memory_space<vmem>>, vector<32x1xf32>
    %20 = vector.broadcast %19 : vector<32x1xf32> to vector<32x256xf32>
    %21 = arith.addf %18, %20 : vector<32x256xf32>
    %cst_8 = arith.constant dense<0xFF800000> : vector<256xf32>
    %22 = vector.multi_reduction <maximumf>, %21, %cst_8 [0] : vector<32x256xf32> to vector<256xf32>
    %23 = vector.shape_cast %22 : vector<256xf32> to vector<1x256xf32>
    %24 = vector.broadcast %23 : vector<1x256xf32> to vector<32x256xf32>
    %25 = arith.subf %21, %24 : vector<32x256xf32>
    %26 = math.exp %25 : vector<32x256xf32>
    %cst_9 = arith.constant dense<0.000000e+00> : vector<256xf32>
    %27 = vector.multi_reduction <add>, %26, %cst_9 [0] : vector<32x256xf32> to vector<256xf32>
    %28 = vector.shape_cast %27 : vector<256xf32> to vector<1x256xf32>
    %29 = tpu.reciprocal %28 {approx = true} : vector<1x256xf32> -> vector<1x256xf32>
    %30 = vector.broadcast %29 : vector<1x256xf32> to vector<32x256xf32>
    %31 = arith.mulf %26, %30 : vector<32x256xf32>
    %c0_10 = arith.constant 0 : index
    %c0_11 = arith.constant 0 : index
    %32 = vector.load %arg5[%c0_10, %c0_11] : memref<16x32xbf16, #tpu.memory_space<vmem>>, vector<16x32xbf16>
    %33 = arith.truncf %31 : vector<32x256xf32> to vector<32x256xbf16>
    %cst_12 = arith.constant dense<0.000000e+00> : vector<16x256xf32>
    %34 = tpu.matmul %32, %33, %cst_12 {dimension_numbers = #tpu.dot_dimension_numbers<[1], [0], [0], [1], [0, 0, 1, 1], [], []>} : vector<16x32xbf16>, vector<32x256xbf16>, vector<16x256xf32> -> vector<16x256xf32>
    %c0_13 = arith.constant 0 : index
    %c0_14 = arith.constant 0 : index
    %35 = vector.load %arg6[%c0_13, %c0_14] : memref<16x1xf32, #tpu.memory_space<vmem>>, vector<16x1xf32>
    %36 = vector.broadcast %35 : vector<16x1xf32> to vector<16x256xf32>
    %37 = arith.addf %34, %36 : vector<16x256xf32>
    %cst_15 = arith.constant dense<0xFF800000> : vector<256xf32>
    %38 = vector.multi_reduction <maximumf>, %37, %cst_15 [0] : vector<16x256xf32> to vector<256xf32>
    %39 = vector.shape_cast %38 : vector<256xf32> to vector<1x256xf32>
    %40 = vector.broadcast %39 : vector<1x256xf32> to vector<16x256xf32>
    %41 = arith.subf %37, %40 : vector<16x256xf32>
    %42 = math.exp %41 : vector<16x256xf32>
    %c0_16 = arith.constant 0 : index
    %c0_17 = arith.constant 0 : index
    %43 = vector.load %arg7[%c0_16, %c0_17] : memref<16x1xf32, #tpu.memory_space<vmem>>, vector<16x1xf32>
    %44 = vector.broadcast %43 : vector<16x1xf32> to vector<16x256xf32>
    %45 = arith.mulf %42, %44 : vector<16x256xf32>
    %cst_18 = arith.constant dense<0.000000e+00> : vector<256xf32>
    %46 = vector.multi_reduction <add>, %45, %cst_18 [0] : vector<16x256xf32> to vector<256xf32>
    %47 = vector.shape_cast %46 : vector<256xf32> to vector<1x256xf32>
    %cst_19 = arith.constant dense<0.000000e+00> : vector<256xf32>
    %48 = vector.multi_reduction <add>, %42, %cst_19 [0] : vector<16x256xf32> to vector<256xf32>
    %49 = vector.shape_cast %48 : vector<256xf32> to vector<1x256xf32>
    %50 = tpu.reciprocal %49 {approx = true} : vector<1x256xf32> -> vector<1x256xf32>
    %51 = arith.mulf %47, %50 : vector<1x256xf32>
    %c0_20 = arith.constant 0 : index
    %52 = memref.load %arg8[%c0_20] : memref<1xf32, #tpu.memory_space<smem>>
    %53 = vector.broadcast %52 : f32 to vector<1x256xf32>
    %54 = arith.addf %51, %53 : vector<1x256xf32>
    %55 = arith.negf %54 : vector<1x256xf32>
    %56 = math.exp %55 : vector<1x256xf32>
    %cst_21 = arith.constant 1.000000e+00 : f32
    %57 = vector.broadcast %cst_21 : f32 to vector<1x256xf32>
    %58 = arith.addf %57, %56 : vector<1x256xf32>
    %59 = arith.divf %57, %58 : vector<1x256xf32>
    %c0_22 = arith.constant 0 : index
    %c0_23 = arith.constant 0 : index
    %60 = vector.load %arg9[%c0_22, %c0_23] : memref<1x256xf32, #tpu.memory_space<vmem>>, vector<1x256xf32>
    tpu.vector_store %arg9[%c0_22, %c0_23], %59 {strides = array<i32>} : memref<1x256xf32, #tpu.memory_space<vmem>>, vector<1x256xf32>,
    return
  }
  func.func @transform_0(%arg0: i32) -> (i32, i32) {
    %c0_i32 = arith.constant 0 : i32
    %c0_i32_0 = arith.constant 0 : i32
    return %c0_i32, %arg0 : i32, i32
  }
  func.func @transform_1(%arg0: i32) -> (i32, i32) {
    %c0_i32 = arith.constant 0 : i32
    %c0_i32_0 = arith.constant 0 : i32
    %c0_i32_1 = arith.constant 0 : i32
    return %c0_i32, %c0_i32_0 : i32, i32
  }
  func.func @transform_2(%arg0: i32) -> (i32, i32) {
    %c0_i32 = arith.constant 0 : i32
    %c0_i32_0 = arith.constant 0 : i32
    %c0_i32_1 = arith.constant 0 : i32
    return %c0_i32, %c0_i32_0 : i32, i32
  }
  func.func @transform_3(%arg0: i32) -> (i32, i32) {
    %c0_i32 = arith.constant 0 : i32
    %c0_i32_0 = arith.constant 0 : i32
    %c0_i32_1 = arith.constant 0 : i32
    return %c0_i32, %c0_i32_0 : i32, i32
  }
  func.func @transform_4(%arg0: i32) -> (i32, i32) {
    %c0_i32 = arith.constant 0 : i32
    %c0_i32_0 = arith.constant 0 : i32
    %c0_i32_1 = arith.constant 0 : i32
    return %c0_i32, %c0_i32_0 : i32, i32
  }
  func.func @transform_5(%arg0: i32) -> (i32, i32) {
    %c0_i32 = arith.constant 0 : i32
    %c0_i32_0 = arith.constant 0 : i32
    %c0_i32_1 = arith.constant 0 : i32
    return %c0_i32, %c0_i32_0 : i32, i32
  }
  func.func @transform_6(%arg0: i32) -> (i32, i32) {
    %c0_i32 = arith.constant 0 : i32
    %c0_i32_0 = arith.constant 0 : i32
    %c0_i32_1 = arith.constant 0 : i32
    return %c0_i32, %c0_i32_0 : i32, i32
  }
  func.func @transform_7(%arg0: i32) -> i32 {
    %c0_i32 = arith.constant 0 : i32
    %c0_i32_0 = arith.constant 0 : i32
    return %c0_i32 : i32
  }
  func.func @transform_8(%arg0: i32) -> (i32, i32) {
    %c0_i32 = arith.constant 0 : i32
    %c0_i32_0 = arith.constant 0 : i32
    return %c0_i32, %arg0 : i32, i32
  }
}

</mosaic_0001>

<llo_original>
// kernel: _lambda_.1
$region0: #{_lambda_.1}
  #allocation0 [shape = 'u32[]', space=smem, size = 0x4, offset = 0x4, fixed_abs, tag = 'smem constant byte address 0x4 - core index']
  #allocation1 [shape = 'u32[144,128]{1,0:T(1,128)}', space=vmem, size = 0x12000, scoped, tag = 'internal scratch']
  #allocation2 [shape = 'f32[1]{0:T(128)S(6)}', space=smem, size = 0x200, scoped, tag = 'scoped memory for _lambda_.1']
  %s0 = inlined_call_operand.vmem [shape: s32[2,512], index: 0, kind: input, shape index: {}]
  %s1 = inlined_call_operand.vmem [shape: bf16[32,64], index: 1, kind: input, shape index: {}]
  %s2 = inlined_call_operand.vmem [shape: bf16[32,64], index: 2, kind: input, shape index: {}]
  %s3 = inlined_call_operand.vmem [shape: f32[32,1], index: 3, kind: input, shape index: {}]
  %s4 = inlined_call_operand.vmem [shape: bf16[16,32], index: 4, kind: input, shape index: {}]
  %s5 = inlined_call_operand.vmem [shape: f32[16,1], index: 5, kind: input, shape index: {}]
  %s6 = inlined_call_operand.vmem [shape: f32[16,1], index: 6, kind: input, shape index: {}]
  %s7 = inlined_call_operand.<no memory space> [shape: f32[1], index: 7, kind: input, shape index: {}]
  %s8 = inlined_call_operand.vmem [shape: f32[1,512], index: 8, kind: output, shape index: {}]
  %s9 = sld [smem:[#allocation0]]
  $region65: #{_lambda_.1} parent=0
    _
  %s11 = ssub.s32 1, %s9
  %s12 = scalar_select 0, %s11, %s9
  %13 = sst [smem:[#allocation2]] %s7
  loop: start=0, step=1, limit=4
  $region2: #{_lambda_.1} parent=0 // loop_pre_header
    _
  $region3: #{_lambda_.1} parent=0 // loop_header
    %s15 = sphi 0, %s19
    %p16 = scmp.ge.s32.totalorder %s15, 4
    %s25 = sphi 0, %s27
    %s28 = sphi 0, %s25
    %s29 = sphi 0, %s28
    %s45 = sphi 0, %s29
    %s49 = sphi 0, %s49
    %s51 = sphi 0, %s49
    %s52 = sphi 0, %s51
    %s66 = sphi 0, %s52
    %s70 = sphi 0, %s70
    %s72 = sphi 0, %s70
    %s73 = sphi 0, %s72
    %s87 = sphi 0, %s73
    %s91 = sphi 0, %s91
    %s93 = sphi 0, %s91
    %s94 = sphi 0, %s93
    %s108 = sphi 0, %s94
    %s112 = sphi 0, %s112
    %s114 = sphi 0, %s112
    %s115 = sphi 0, %s114
    %s129 = sphi 0, %s115
    %s133 = sphi 0, %s133
    %s135 = sphi 0, %s133
    %s136 = sphi 0, %s135
    %s150 = sphi 0, %s136
    %s154 = sphi 0, %s154
    %s156 = sphi 0, %s154
    %s157 = sphi 0, %s156
    %s171 = sphi 0, %s157
    %s175 = sphi 0, %s175
    %s177 = sphi 0, %s175
    %s178 = sphi 0, %s177
    %s192 = sphi 0, %s178
    %s198 = sphi 0, %s200
    %s201 = sphi 0, %s198
    %s202 = sphi 0, %s201
    %s218 = sphi 0, %s202
  $region4: #{_lambda_.1} parent=0 // loop_header_branch
    %18 = sbr.rel (%p16) target = $region8
  $region5: #{_lambda_.1} parent=0 // loop_body
    %s20 = ssub.s32 %s15, 1
    %s21 = ssub.s32 %s15, 2
    %s22 = sadd.s32 %s15, 1
    %s23 = ssub.s32 %s15, %s22
    %p24 = scmp.eq.s32.totalorder %s23, 0
    %s26 = sadd.s32 %s25, 1
    %s27 = scalar_select %p24, %s25, %s26
    %p30 = pneg %p24
    %p31 = scmp.eq.s32.totalorder %s15, 1
    %p32 = por %p30, %p31
    %p33 = scmp.ne.s32.totalorder %s25, %s28
    %p34 = scmp.eq.s32.totalorder %s15, 0
    %p35 = por %p33, %p34
    %p36 = scmp.ne.s32.totalorder %s25, %s28
    %p37 = scmp.eq.s32.totalorder %s20, 1
    %p38 = por %p36, %p37
    %p39 = scmp.ne.s32.totalorder %s28, %s29
    %p40 = scmp.eq.s32.totalorder %s20, 0
    %p41 = por %p39, %p40
    %p42 = scmp.ne.s32.totalorder %s28, %s29
    %p43 = scmp.eq.s32.totalorder %s21, 1
    %p44 = por %p42, %p43
    %p46 = scmp.ne.s32.totalorder %s29, %s45
    %p47 = scmp.eq.s32.totalorder %s21, 0
    %p48 = por %p46, %p47
    %s50 = sadd.s32 %s49, 1
    %p53 = scmp.eq.s32.totalorder %s15, 1
    %p54 = scmp.ne.s32.totalorder %s49, %s51
    %p55 = scmp.eq.s32.totalorder %s15, 0
    %p56 = por %p54, %p55
    %p57 = scmp.ne.s32.totalorder %s49, %s51
    %p58 = scmp.eq.s32.totalorder %s20, 1
    %p59 = por %p57, %p58
    %p60 = scmp.ne.s32.totalorder %s51, %s52
    %p61 = scmp.eq.s32.totalorder %s20, 0
    %p62 = por %p60, %p61
    %p63 = scmp.ne.s32.totalorder %s51, %s52
    %p64 = scmp.eq.s32.totalorder %s21, 1
    %p65 = por %p63, %p64
    %p67 = scmp.ne.s32.totalorder %s52, %s66
    %p68 = scmp.eq.s32.totalorder %s21, 0
    %p69 = por %p67, %p68
    %s71 = sadd.s32 %s70, 1
    %p74 = scmp.eq.s32.totalorder %s15, 1
    %p75 = scmp.ne.s32.totalorder %s70, %s72
    %p76 = scmp.eq.s32.totalorder %s15, 0
    %p77 = por %p75, %p76
    %p78 = scmp.ne.s32.totalorder %s70, %s72
    %p79 = scmp.eq.s32.totalorder %s20, 1
    %p80 = por %p78, %p79
    %p81 = scmp.ne.s32.totalorder %s72, %s73
    %p82 = scmp.eq.s32.totalorder %s20, 0
    %p83 = por %p81, %p82
    %p84 = scmp.ne.s32.totalorder %s72, %s73
    %p85 = scmp.eq.s32.totalorder %s21, 1
    %p86 = por %p84, %p85
    %p88 = scmp.ne.s32.totalorder %s73, %s87
    %p89 = scmp.eq.s32.totalorder %s21, 0
    %p90 = por %p88, %p89
    %s92 = sadd.s32 %s91, 1
    %p95 = scmp.eq.s32.totalorder %s15, 1
    %p96 = scmp.ne.s32.totalorder %s91, %s93
    %p97 = scmp.eq.s32.totalorder %s15, 0
    %p98 = por %p96, %p97
    %p99 = scmp.ne.s32.totalorder %s91, %s93
    %p100 = scmp.eq.s32.totalorder %s20, 1
    %p101 = por %p99, %p100
    %p102 = scmp.ne.s32.totalorder %s93, %s94
    %p103 = scmp.eq.s32.totalorder %s20, 0
    %p104 = por %p102, %p103
    %p105 = scmp.ne.s32.totalorder %s93, %s94
    %p106 = scmp.eq.s32.totalorder %s21, 1
    %p107 = por %p105, %p106
    %p109 = scmp.ne.s32.totalorder %s94, %s108
    %p110 = scmp.eq.s32.totalorder %s21, 0
    %p111 = por %p109, %p110
    %s113 = sadd.s32 %s112, 1
    %p116 = scmp.eq.s32.totalorder %s15, 1
    %p117 = scmp.ne.s32.totalorder %s112, %s114
    %p118 = scmp.eq.s32.totalorder %s15, 0
    %p119 = por %p117, %p118
    %p120 = scmp.ne.s32.totalorder %s112, %s114
    %p121 = scmp.eq.s32.totalorder %s20, 1
    %p122 = por %p120, %p121
    %p123 = scmp.ne.s32.totalorder %s114, %s115
    %p124 = scmp.eq.s32.totalorder %s20, 0
    %p125 = por %p123, %p124
    %p126 = scmp.ne.s32.totalorder %s114, %s115
    %p127 = scmp.eq.s32.totalorder %s21, 1
    %p128 = por %p126, %p127
    %p130 = scmp.ne.s32.totalorder %s115, %s129
    %p131 = scmp.eq.s32.totalorder %s21, 0
    %p132 = por %p130, %p131
    %s134 = sadd.s32 %s133, 1
    %p137 = scmp.eq.s32.totalorder %s15, 1
    %p138 = scmp.ne.s32.totalorder %s133, %s135
    %p139 = scmp.eq.s32.totalorder %s15, 0
    %p140 = por %p138, %p139
    %p141 = scmp.ne.s32.totalorder %s133, %s135
    %p142 = scmp.eq.s32.totalorder %s20, 1
    %p143 = por %p141, %p142
    %p144 = scmp.ne.s32.totalorder %s135, %s136
    %p145 = scmp.eq.s32.totalorder %s20, 0
    %p146 = por %p144, %p145
    %p147 = scmp.ne.s32.totalorder %s135, %s136
    %p148 = scmp.eq.s32.totalorder %s21, 1
    %p149 = por %p147, %p148
    %p151 = scmp.ne.s32.totalorder %s136, %s150
    %p152 = scmp.eq.s32.totalorder %s21, 0
    %p153 = por %p151, %p152
    %s155 = sadd.s32 %s154, 1
    %p158 = scmp.eq.s32.totalorder %s15, 1
    %p159 = scmp.ne.s32.totalorder %s154, %s156
    %p160 = scmp.eq.s32.totalorder %s15, 0
    %p161 = por %p159, %p160
    %p162 = scmp.ne.s32.totalorder %s154, %s156
    %p163 = scmp.eq.s32.totalorder %s20, 1
    %p164 = por %p162, %p163
    %p165 = scmp.ne.s32.totalorder %s156, %s157
    %p166 = scmp.eq.s32.totalorder %s20, 0
    %p167 = por %p165, %p166
    %p168 = scmp.ne.s32.totalorder %s156, %s157
    %p169 = scmp.eq.s32.totalorder %s21, 1
    %p170 = por %p168, %p169
    %p172 = scmp.ne.s32.totalorder %s157, %s171
    %p173 = scmp.eq.s32.totalorder %s21, 0
    %p174 = por %p172, %p173
    %s176 = sadd.s32 %s175, 1
    %p179 = scmp.eq.s32.totalorder %s15, 1
    %p180 = scmp.ne.s32.totalorder %s175, %s177
    %p181 = scmp.eq.s32.totalorder %s15, 0
    %p182 = por %p180, %p181
    %p183 = scmp.ne.s32.totalorder %s175, %s177
    %p184 = scmp.eq.s32.totalorder %s20, 1
    %p185 = por %p183, %p184
    %p186 = scmp.ne.s32.totalorder %s177, %s178
    %p187 = scmp.eq.s32.totalorder %s20, 0
    %p188 = por %p186, %p187
    %p189 = scmp.ne.s32.totalorder %s177, %s178
    %p190 = scmp.eq.s32.totalorder %s21, 1
    %p191 = por %p189, %p190
    %p193 = scmp.ne.s32.totalorder %s178, %s192
    %p194 = scmp.eq.s32.totalorder %s21, 0
    %p195 = por %p193, %p194
    %s196 = ssub.s32 %s15, %s22
    %p197 = scmp.eq.s32.totalorder %s196, 0
    %s199 = sadd.s32 %s198, 1
    %s200 = scalar_select %p197, %s198, %s199
    %p203 = pneg %p197
    %p204 = scmp.eq.s32.totalorder %s15, 1
    %p205 = por %p203, %p204
    %p206 = scmp.ne.s32.totalorder %s198, %s201
    %p207 = scmp.eq.s32.totalorder %s15, 0
    %p208 = por %p206, %p207
    %p209 = scmp.ne.s32.totalorder %s198, %s201
    %p210 = scmp.eq.s32.totalorder %s20, 1
    %p211 = por %p209, %p210
    %p212 = scmp.ne.s32.totalorder %s201, %s202
    %p213 = scmp.eq.s32.totalorder %s20, 0
    %p214 = por %p212, %p213
    %p215 = scmp.ne.s32.totalorder %s201, %s202
    %p216 = scmp.eq.s32.totalorder %s21, 1
    %p217 = por %p215, %p216
    %p219 = scmp.ne.s32.totalorder %s202, %s218
    %p220 = scmp.eq.s32.totalorder %s21, 0
    %p221 = por %p219, %p220
    %p222 = scmp.le.s32.totalorder 1, %s15
    %p223 = scmp.lt.s32.totalorder %s15, 3
    %p224 = pnand %p222, %p223
    %p225 = pneg %p224
    // Predicated region
    $region9: #{_lambda_.1} parent=5 // pred_check
      _
    $region10: #{_lambda_.1} parent=5 // pred_check_branch
      %227 = sbr.rel (%p224) target = $region12
    $region11: #{_lambda_.1} parent=5 // pred_region
      %s228 = ssub.s32 %s15, 1
      // Predicated region
      $region13: #{_lambda_.1} parent=11 // pred_check
        %p229 = pneg %p62
      $region14: #{_lambda_.1} parent=11 // pred_check_branch
        %231 = sbr.rel (%p229) target = $region16
      $region15: #{_lambda_.1} parent=11 // pred_region
        _
      $region16: #{_lambda_.1} parent=11 // pred_fallthru
        _
      // Predicated region
      $region17: #{_lambda_.1} parent=11 // pred_check
        %p232 = pneg %p83
      $region18: #{_lambda_.1} parent=11 // pred_check_branch
        %234 = sbr.rel (%p232) target = $region20
      $region19: #{_lambda_.1} parent=11 // pred_region
        _
      $region20: #{_lambda_.1} parent=11 // pred_fallthru
        _
      // Predicated region
      $region21: #{_lambda_.1} parent=11 // pred_check
        %p235 = pneg %p104
      $region22: #{_lambda_.1} parent=11 // pred_check_branch
        %237 = sbr.rel (%p235) target = $region24
      $region23: #{_lambda_.1} parent=11 // pred_region
        _
      $region24: #{_lambda_.1} parent=11 // pred_fallthru
        _
      // Predicated region
      $region25: #{_lambda_.1} parent=11 // pred_check
        %p238 = pneg %p125
      $region26: #{_lambda_.1} parent=11 // pred_check_branch
        %240 = sbr.rel (%p238) target = $region28
      $region27: #{_lambda_.1} parent=11 // pred_region
        _
      $region28: #{_lambda_.1} parent=11 // pred_fallthru
        _
      // Predicated region
      $region29: #{_lambda_.1} parent=11 // pred_check
        %p241 = pneg %p146
      $region30: #{_lambda_.1} parent=11 // pred_check_branch
        %243 = sbr.rel (%p241) target = $region32
      $region31: #{_lambda_.1} parent=11 // pred_region
        _
      $region32: #{_lambda_.1} parent=11 // pred_fallthru
        _
      // Predicated region
      $region33: #{_lambda_.1} parent=11 // pred_check
        %p244 = pneg %p167
      $region34: #{_lambda_.1} parent=11 // pred_check_branch
        %246 = sbr.rel (%p244) target = $region36
      $region35: #{_lambda_.1} parent=11 // pred_region
        _
      $region36: #{_lambda_.1} parent=11 // pred_fallthru
        _
      // Predicated region
      $region37: #{_lambda_.1} parent=11 // pred_check
        %p247 = pneg %p188
      $region38: #{_lambda_.1} parent=11 // pred_check_branch
        %249 = sbr.rel (%p247) target = $region40
      $region39: #{_lambda_.1} parent=11 // pred_region
        _
      $region40: #{_lambda_.1} parent=11 // pred_fallthru
        _
    $region12: #{_lambda_.1} parent=5 // pred_fallthru
      _
    %p250 = scmp.lt.s32.totalorder %s15, 2
    // Predicated region
    $region41: #{_lambda_.1} parent=5 // pred_check
      %p251 = pneg %p250
    $region42: #{_lambda_.1} parent=5 // pred_check_branch
      %253 = sbr.rel (%p251) target = $region44
    $region43: #{_lambda_.1} parent=5 // pred_region
      // Predicated region
      $region45: #{_lambda_.1} parent=43 // pred_check
        %p254 = pneg %p35
      $region46: #{_lambda_.1} parent=43 // pred_check_branch
        %256 = sbr.rel (%p254) target = $region48
      $region47: #{_lambda_.1} parent=43 // pred_region
        %s257 = smul.u32 2, %s15
        %p258 = scmp.lt.s32.totalorder %s257, 3
        %s259 = scalar_select %p258, %s257, 3
        %s260 = smul.addr %s259, 2
        %s261 = scalar_lea.vmem %s0, %s260
        %s262 = smul.u32 2, %s15
      $region48: #{_lambda_.1} parent=43 // pred_fallthru
        _
    $region44: #{_lambda_.1} parent=5 // pred_fallthru
      _
    %p263 = scmp.le.s32.totalorder 1, %s15
    %p264 = scmp.lt.s32.totalorder %s15, 3
    %p265 = pnand %p263, %p264
    %p266 = pneg %p265
    // Predicated region
    $region49: #{_lambda_.1} parent=5 // pred_check
      _
    $region50: #{_lambda_.1} parent=5 // pred_check_branch
      %268 = sbr.rel (%p265) target = $region52
    $region51: #{_lambda_.1} parent=5 // pred_region
      %s269 = ssub.s32 %s15, 1
      %s270 = smul.u32 2, %s20
      %p271 = scmp.lt.s32.totalorder %s270, 3
      %s272 = scalar_select %p271, %s270, 3
      %s273 = smul.addr %s272, 2
      %s274 = scalar_lea.vmem %s0, %s273
      %p275 = pneg %p41
      %p276 = pneg %p38
      %p277 = pneg %p62
      %p278 = pneg %p59
      %p279 = pneg %p83
      %p280 = pneg %p80
      %p281 = pneg %p104
      %p282 = pneg %p101
      %p283 = pneg %p125
      %p284 = pneg %p122
      %p285 = pneg %p146
      %p286 = pneg %p143
      %p287 = pneg %p167
      %p288 = pneg %p164
      %p289 = pneg %p188
      %p290 = pneg %p185
      %p291 = pneg %p214
      %p292 = pneg %p211
      %s293 = smul.u32 2, %s20
      %p294 = scmp.lt.s32.totalorder %s293, 3
      %s295 = scalar_select %p294, %s293, 3
      %s296 = scalar_lea.vmem %s8, %s295
      %s297 = smul.u32 2, %s20
      %p298 = scmp.lt.s32.totalorder %s297, 3
      %s299 = scalar_select %p298, %s297, 3
      %s300 = smul.addr %s299, 2
      %s301 = scalar_lea.vmem %s0, %s300
      %s302 = smul.u32 2, %s20
      %s303 = smul.u32 2, %s20
      %p304 = scmp.lt.s32.totalorder %s303, 3
      %s305 = scalar_select %p304, %s303, 3
      %s306 = scalar_lea.vmem %s8, %s305
      %s307 = smul.u32 2, %s20
      %v309 = vld [vmem:[%s301] sm:$0xf]
      %v310 = vlaneseq
      %v311 = vshrl.u32 %v310, 7
      %v312 = vadd.s32 %v311, 8
      %v313 = vadd.s32 %v311, 16
      %v314 = vadd.s32 %v311, 24
      %v315 = vadd.s32 %v311, 32
      %v316 = vadd.s32 %v311, 40
      %v317 = vadd.s32 %v311, 48
      %v318 = vadd.s32 %v311, 56
      %v319 = vlaneseq
      %v320 = vshrl.u32 %v319, 7
      %v321 = vsub.s32 0, %v320
      %v322 = vrot.slane %v309, %v321
      %v323 = vlaneseq
      %v324 = vshrl.u32 %v323, 7
      %v325 = vsub.s32 2, %v324
      %v326 = vrot.slane %v309, %v325
      %v327 = vlaneseq
      %v328 = vshrl.u32 %v327, 7
      %v329 = vsub.s32 0, %v328
      %v330 = vrot.slane %v322, %v329
      %v331 = vlaneseq
      %v332 = vshrl.u32 %v331, 7
      %v333 = vsub.s32 0, %v332
      %v334 = vrot.slane %v326, %v333
      %vm335 = vcmp.eq.s32.totalorder %v311, %v330
      %vm336 = vcmp.eq.s32.totalorder %v311, %v334
      %vm337 = vcmp.eq.s32.totalorder %v312, %v330
      %vm338 = vcmp.eq.s32.totalorder %v312, %v334
      %vm339 = vcmp.eq.s32.totalorder %v313, %v330
      %vm340 = vcmp.eq.s32.totalorder %v313, %v334
      %vm341 = vcmp.eq.s32.totalorder %v314, %v330
      %vm342 = vcmp.eq.s32.totalorder %v314, %v334
      %vm343 = vcmp.eq.s32.totalorder %v315, %v330
      %vm344 = vcmp.eq.s32.totalorder %v315, %v334
      %vm345 = vcmp.eq.s32.totalorder %v316, %v330
      %vm346 = vcmp.eq.s32.totalorder %v316, %v334
      %vm347 = vcmp.eq.s32.totalorder %v317, %v330
      %vm348 = vcmp.eq.s32.totalorder %v317, %v334
      %vm349 = vcmp.eq.s32.totalorder %v318, %v330
      %vm350 = vcmp.eq.s32.totalorder %v318, %v334
      %v351 = vsel %vm335, 1, 0
      %v352 = vsel %vm336, 1, 0
      %v353 = vsel %vm337, 1, 0
      %v354 = vsel %vm338, 1, 0
      %v355 = vsel %vm339, 1, 0
      %v356 = vsel %vm340, 1, 0
      %v357 = vsel %vm341, 1, 0
      %v358 = vsel %vm342, 1, 0
      %v359 = vsel %vm343, 1, 0
      %v360 = vsel %vm344, 1, 0
      %v361 = vsel %vm345, 1, 0
      %v362 = vsel %vm346, 1, 0
      %v363 = vsel %vm347, 1, 0
      %v364 = vsel %vm348, 1, 0
      %v365 = vsel %vm349, 1, 0
      %v366 = vsel %vm350, 1, 0
      %v367 = vcvt.s32.f32 %v351
      %v368 = vcvt.s32.f32 %v352
      %v369 = vcvt.s32.f32 %v353
      %v370 = vcvt.s32.f32 %v354
      %v371 = vcvt.s32.f32 %v355
      %v372 = vcvt.s32.f32 %v356
      %v373 = vcvt.s32.f32 %v357
      %v374 = vcvt.s32.f32 %v358
      %v375 = vcvt.s32.f32 %v359
      %v376 = vcvt.s32.f32 %v360
      %v377 = vcvt.s32.f32 %v361
      %v378 = vcvt.s32.f32 %v362
      %v379 = vcvt.s32.f32 %v363
      %v380 = vcvt.s32.f32 %v364
      %v381 = vcvt.s32.f32 %v365
      %v382 = vcvt.s32.f32 %v366
      %v383 = vpack.c.bf16 %v369, %v367
      %v384 = vpack.c.bf16 %v370, %v368
      %v385 = vpack.c.bf16 %v373, %v371
      %v386 = vpack.c.bf16 %v374, %v372
      %v387 = vpack.c.bf16 %v377, %v375
      %v388 = vpack.c.bf16 %v378, %v376
      %v389 = vpack.c.bf16 %v381, %v379
      %v390 = vpack.c.bf16 %v382, %v380
      %v391 = vlaneseq
      %v392 = vshrl.u32 %v391, 7
      %v393 = vsub.s32 1, %v392
      %v394 = vrot.slane %v309, %v393
      %v395 = vlaneseq
      %v396 = vshrl.u32 %v395, 7
      %v397 = vsub.s32 3, %v396
      %v398 = vrot.slane %v309, %v397
      %v399 = vlaneseq
      %v400 = vshrl.u32 %v399, 7
      %v401 = vsub.s32 1, %v400
      %v402 = vrot.slane %v394, %v401
      %v403 = vlaneseq
      %v404 = vshrl.u32 %v403, 7
      %v405 = vsub.s32 1, %v404
      %v406 = vrot.slane %v398, %v405
      %vm407 = vcmp.eq.s32.totalorder %v311, %v402
      %vm408 = vcmp.eq.s32.totalorder %v311, %v406
      %vm409 = vcmp.eq.s32.totalorder %v312, %v402
      %vm410 = vcmp.eq.s32.totalorder %v312, %v406
      %vm411 = vcmp.eq.s32.totalorder %v313, %v402
      %vm412 = vcmp.eq.s32.totalorder %v313, %v406
      %vm413 = vcmp.eq.s32.totalorder %v314, %v402
      %vm414 = vcmp.eq.s32.totalorder %v314, %v406
      %vm415 = vcmp.eq.s32.totalorder %v315, %v402
      %vm416 = vcmp.eq.s32.totalorder %v315, %v406
      %vm417 = vcmp.eq.s32.totalorder %v316, %v402
      %vm418 = vcmp.eq.s32.totalorder %v316, %v406
      %vm419 = vcmp.eq.s32.totalorder %v317, %v402
      %vm420 = vcmp.eq.s32.totalorder %v317, %v406
      %vm421 = vcmp.eq.s32.totalorder %v318, %v402
      %vm422 = vcmp.eq.s32.totalorder %v318, %v406
      %v423 = vsel %vm407, 1, 0
      %v424 = vsel %vm408, 1, 0
      %v425 = vsel %vm409, 1, 0
      %v426 = vsel %vm410, 1, 0
      %v427 = vsel %vm411, 1, 0
      %v428 = vsel %vm412, 1, 0
      %v429 = vsel %vm413, 1, 0
      %v430 = vsel %vm414, 1, 0
      %v431 = vsel %vm415, 1, 0
      %v432 = vsel %vm416, 1, 0
      %v433 = vsel %vm417, 1, 0
      %v434 = vsel %vm418, 1, 0
      %v435 = vsel %vm419, 1, 0
      %v436 = vsel %vm420, 1, 0
      %v437 = vsel %vm421, 1, 0
      %v438 = vsel %vm422, 1, 0
      %v439 = vcvt.s32.f32 %v423
      %v440 = vcvt.s32.f32 %v424
      %v441 = vcvt.s32.f32 %v425
      %v442 = vcvt.s32.f32 %v426
      %v443 = vcvt.s32.f32 %v427
      %v444 = vcvt.s32.f32 %v428
      %v445 = vcvt.s32.f32 %v429
      %v446 = vcvt.s32.f32 %v430
      %v447 = vcvt.s32.f32 %v431
      %v448 = vcvt.s32.f32 %v432
      %v449 = vcvt.s32.f32 %v433
      %v450 = vcvt.s32.f32 %v434
      %v451 = vcvt.s32.f32 %v435
      %v452 = vcvt.s32.f32 %v436
      %v453 = vcvt.s32.f32 %v437
      %v454 = vcvt.s32.f32 %v438
      %v455 = vpack.c.bf16 %v441, %v439
      %v456 = vpack.c.bf16 %v442, %v440
      %v457 = vpack.c.bf16 %v445, %v443
      %v458 = vpack.c.bf16 %v446, %v444
      %v459 = vpack.c.bf16 %v449, %v447
      %v460 = vpack.c.bf16 %v450, %v448
      %v461 = vpack.c.bf16 %v453, %v451
      %v462 = vpack.c.bf16 %v454, %v452
      %v463 = vld [vmem:[%s1] sm:$0xf]
      %v464 = vld [vmem:[%s1 + $0x4] sm:$0xf]
      %v465 = vld [vmem:[%s1 + $0x8] sm:$0xf]
      %v466 = vld [vmem:[%s1 + $0xc] sm:$0xf]
      %v467 = vld [vmem:[%s2] sm:$0xf]
      %v468 = vld [vmem:[%s2 + $0x4] sm:$0xf]
      %v469 = vld [vmem:[%s2 + $0x8] sm:$0xf]
      %v470 = vld [vmem:[%s2 + $0xc] sm:$0xf]
      %v475 = vunpack.c.l.b16 %v467
      %v476 = vunpack.c.l.b16 %v468
      %v477 = vunpack.c.l.b16 %v469
      %v478 = vunpack.c.l.b16 %v470
      %v479 = vpack.c.b16 %v476, %v475
      %v480 = vpack.c.b16 %v478, %v477
      %vm481 = vcmask 523264
      %v483 = vsel %vm481, %v479, 0
      %v486 = vsel %vm481, %v480, 0
      %488 = vmatprep.subr.bf16.mxu0 %v456
      %489 = vmatpush1.bf16.msra.mxu0 %v455
      %490 = vmatprep.subr.bf16.mxu0 %v458
      %491 = vmatpush1.bf16.msra.mxu0 %v457
      %492 = vmatprep.subr.bf16.mxu0 %v460
      %493 = vmatpush1.bf16.msra.mxu0 %v459
      %494 = vmatprep.subr.bf16.mxu0 %v462
      %495 = vmatpush1.bf16.msra.mxu0 %v461
      %496 = vmatprep.subr.bf16.mxu0 0
      %497 = vmatpush1.bf16.msra.mxu0 0
      %498 = vmatprep.subr.bf16.mxu0 0
      %499 = vmatpush1.bf16.msra.mxu0 0
      %500 = vmatprep.subr.bf16.mxu0 0
      %501 = vmatpush1.bf16.msra.mxu0 0
      %502 = vmatprep.subr.bf16.mxu0 0
      %503 = vmatpush1.bf16.msra.mxu0 0
      %504 = vmatprep.subr.bf16.mxu0 0
      %505 = vmatpush1.bf16.msra.mxu0 0
      %506 = vmatprep.subr.bf16.mxu0 0
      %507 = vmatpush1.bf16.msra.mxu0 0
      %508 = vmatprep.subr.bf16.mxu0 0
      %509 = vmatpush1.bf16.msra.mxu0 0
      %510 = vmatprep.subr.bf16.mxu0 0
      %511 = vmatpush1.bf16.msra.mxu0 0
      %512 = vmatprep.subr.bf16.mxu0 0
      %513 = vmatpush1.bf16.msra.mxu0 0
      %514 = vmatprep.subr.bf16.mxu0 0
      %515 = vmatpush1.bf16.msra.mxu0 0
      %516 = vmatprep.subr.bf16.mxu0 0
      %517 = vmatpush1.bf16.msra.mxu0 0
      %518 = vmatprep.subr.bf16.mxu0 0
      %519 = vmatpush1.bf16.msra.mxu0 0
      %520 = vmatprep.mubr.bf16.mxu0 0
      %521 = vmatmul.mubr.bf16.gmra.mrb[0].mxu0 %v483
      %v522 = vpop.f32.mrb[0].mxu0
      %v523 = vadd.f32 0.0, %v522
      %v524 = vpop.f32.mrb[0].mxu0
      %v525 = vadd.f32 0.0, %v524
      %v526 = vpop.f32.mrb[0].mxu0
      %v527 = vadd.f32 0.0, %v526
      %v528 = vpop.f32.mrb[0].mxu0
      %v529 = vadd.f32 0.0, %v528
      %530 = vmatprep.mubr.bf16.mxu0 0
      %531 = vmatmul.mubr.bf16.gmra.mrb[0].mxu0 %v486
      %v532 = vpop.f32.mrb[0].mxu0
      %v533 = vadd.f32 0.0, %v532
      %v534 = vpop.f32.mrb[0].mxu0
      %v535 = vadd.f32 0.0, %v534
      %v536 = vpop.f32.mrb[0].mxu0
      %v537 = vadd.f32 0.0, %v536
      %v538 = vpop.f32.mrb[0].mxu0
      %v539 = vadd.f32 0.0, %v538
      %540 = vdwg.mxu0
      %v545 = vunpack.c.l.b16 %v463
      %v546 = vunpack.c.l.b16 %v464
      %v547 = vunpack.c.l.b16 %v465
      %v548 = vunpack.c.l.b16 %v466
      %v549 = vpack.c.b16 %v546, %v545
      %v550 = vpack.c.b16 %v548, %v547
      %v552 = vsel %vm481, %v549, 0
      %v555 = vsel %vm481, %v550, 0
      %557 = vmatprep.subr.bf16.mxu0 %v384
      %558 = vmatpush1.bf16.msra.mxu0 %v383
      %559 = vmatprep.subr.bf16.mxu0 %v386
      %560 = vmatpush1.bf16.msra.mxu0 %v385
      %561 = vmatprep.subr.bf16.mxu0 %v388
      %562 = vmatpush1.bf16.msra.mxu0 %v387
      %563 = vmatprep.subr.bf16.mxu0 %v390
      %564 = vmatpush1.bf16.msra.mxu0 %v389
      %565 = vmatprep.subr.bf16.mxu0 0
      %566 = vmatpush1.bf16.msra.mxu0 0
      %567 = vmatprep.subr.bf16.mxu0 0
      %568 = vmatpush1.bf16.msra.mxu0 0
      %569 = vmatprep.subr.bf16.mxu0 0
      %570 = vmatpush1.bf16.msra.mxu0 0
      %571 = vmatprep.subr.bf16.mxu0 0
      %572 = vmatpush1.bf16.msra.mxu0 0
      %573 = vmatprep.subr.bf16.mxu0 0
      %574 = vmatpush1.bf16.msra.mxu0 0
      %575 = vmatprep.subr.bf16.mxu0 0
      %576 = vmatpush1.bf16.msra.mxu0 0
      %577 = vmatprep.subr.bf16.mxu0 0
      %578 = vmatpush1.bf16.msra.mxu0 0
      %579 = vmatprep.subr.bf16.mxu0 0
      %580 = vmatpush1.bf16.msra.mxu0 0
      %581 = vmatprep.subr.bf16.mxu0 0
      %582 = vmatpush1.bf16.msra.mxu0 0
      %583 = vmatprep.subr.bf16.mxu0 0
      %584 = vmatpush1.bf16.msra.mxu0 0
      %585 = vmatprep.subr.bf16.mxu0 0
      %586 = vmatpush1.bf16.msra.mxu0 0
      %587 = vmatprep.subr.bf16.mxu0 0
      %588 = vmatpush1.bf16.msra.mxu0 0
      %589 = vmatprep.mubr.bf16.mxu0 0
      %590 = vmatmul.mubr.bf16.gmra.mrb[0].mxu0 %v552
      %v591 = vpop.f32.mrb[0].mxu0
      %v592 = vadd.f32 %v523, %v591
      %v593 = vpop.f32.mrb[0].mxu0
      %v594 = vadd.f32 %v525, %v593
      %v595 = vpop.f32.mrb[0].mxu0
      %v596 = vadd.f32 %v527, %v595
      %v597 = vpop.f32.mrb[0].mxu0
      %v598 = vadd.f32 %v529, %v597
      %599 = vmatprep.mubr.bf16.mxu0 0
      %600 = vmatmul.mubr.bf16.gmra.mrb[0].mxu0 %v555
      %v601 = vpop.f32.mrb[0].mxu0
      %v602 = vadd.f32 %v533, %v601
      %v603 = vpop.f32.mrb[0].mxu0
      %v604 = vadd.f32 %v535, %v603
      %v605 = vpop.f32.mrb[0].mxu0
      %v606 = vadd.f32 %v537, %v605
      %v607 = vpop.f32.mrb[0].mxu0
      %v608 = vadd.f32 %v539, %v607
      %609 = vdwg.mxu0
      %v610 = vld [vmem:[%s3] sm:$0xff]
      %v611 = vld [vmem:[%s3 + $0x8] sm:$0xff]
      %v612 = vld [vmem:[%s3 + $0x10] sm:$0xff]
      %v613 = vld [vmem:[%s3 + $0x18] sm:$0xff]
      %615 = vset.pattern.permute.xlu0 0
      %616 = vperm.xlu0 %615, %v610
      %v617 = vpop.permute.xlu0 %616
      %620 = vset.pattern.permute.xlu0 0
      %621 = vperm.xlu0 %620, %v611
      %v622 = vpop.permute.xlu0 %621
      %625 = vset.pattern.permute.xlu0 0
      %626 = vperm.xlu0 %625, %v612
      %v627 = vpop.permute.xlu0 %626
      %630 = vset.pattern.permute.xlu0 0
      %631 = vperm.xlu0 %630, %v613
      %v632 = vpop.permute.xlu0 %631
      %v634 = vadd.f32 %v592, %v617
      %v635 = vadd.f32 %v594, %v617
      %v636 = vadd.f32 %v596, %v622
      %v637 = vadd.f32 %v598, %v622
      %v638 = vadd.f32 %v602, %v627
      %v639 = vadd.f32 %v604, %v627
      %v640 = vadd.f32 %v606, %v632
      %v641 = vadd.f32 %v608, %v632
      %v642 = vmax.f32 %v634, %v638
      %v643 = vmax.f32 %v636, %v640
      %v644 = vmax.f32 %v642, %v643
      %v645 = vrot.slane %v644, 4
      %v646 = vmax.f32 %v644, %v645
      %v647 = vrot.slane %v646, 2
      %v648 = vmax.f32 %v646, %v647
      %v649 = vrot.slane %v648, 1
      %v650 = vmax.f32 %v648, %v649
      %v651 = vmax.f32 %v635, %v639
      %v652 = vmax.f32 %v637, %v641
      %v653 = vmax.f32 %v651, %v652
      %v654 = vrot.slane %v653, 4
      %v655 = vmax.f32 %v653, %v654
      %v656 = vrot.slane %v655, 2
      %v657 = vmax.f32 %v655, %v656
      %v658 = vrot.slane %v657, 1
      %v659 = vmax.f32 %v657, %v658
      %v660 = vsub.f32 %v634, %v650
      %v661 = vsub.f32 %v635, %v659
      %v662 = vsub.f32 %v636, %v650
      %v663 = vsub.f32 %v637, %v659
      %v664 = vsub.f32 %v638, %v650
      %v665 = vsub.f32 %v639, %v659
      %v666 = vsub.f32 %v640, %v650
      %v667 = vsub.f32 %v641, %v659
      %v668 = vmul.f32 %v660, 1.442695
      %v669 = vpow.pop %v668
      %v670 = vmul.f32 %v661, 1.442695
      %v671 = vpow.pop %v670
      %v672 = vmul.f32 %v662, 1.442695
      %v673 = vpow.pop %v672
      %v674 = vmul.f32 %v663, 1.442695
      %v675 = vpow.pop %v674
      %v676 = vmul.f32 %v664, 1.442695
      %v677 = vpow.pop %v676
      %v678 = vmul.f32 %v665, 1.442695
      %v679 = vpow.pop %v678
      %v680 = vmul.f32 %v666, 1.442695
      %v681 = vpow.pop %v680
      %v682 = vmul.f32 %v667, 1.442695
      %v683 = vpow.pop %v682
      %v684 = vadd.f32 %v669, %v673
      %v685 = vadd.f32 %v684, %v677
      %v686 = vadd.f32 %v685, %v681
      %v687 = vrot.slane %v686, 4
      %v688 = vadd.f32 %v686, %v687
      %v689 = vrot.slane %v688, 2
      %v690 = vadd.f32 %v688, %v689
      %v691 = vrot.slane %v690, 1
      %v692 = vadd.f32 %v690, %v691
      %v693 = vadd.f32 %v671, %v675
      %v694 = vadd.f32 %v693, %v679
      %v695 = vadd.f32 %v694, %v683
      %v696 = vrot.slane %v695, 4
      %v697 = vadd.f32 %v695, %v696
      %v698 = vrot.slane %v697, 2
      %v699 = vadd.f32 %v697, %v698
      %v700 = vrot.slane %v699, 1
      %v701 = vadd.f32 %v699, %v700
      %v702 = vrcp.pop %v692
      %v703 = vrcp.pop %v701
      %v704 = vmul.f32 %v669, %v702
      %v705 = vmul.f32 %v671, %v703
      %v706 = vmul.f32 %v673, %v702
      %v707 = vmul.f32 %v675, %v703
      %v708 = vmul.f32 %v677, %v702
      %v709 = vmul.f32 %v679, %v703
      %v710 = vmul.f32 %v681, %v702
      %v711 = vmul.f32 %v683, %v703
      %v712 = vld [vmem:[%s4] sm:$0xf]
      %v713 = vld [vmem:[%s4 + $0x4] sm:$0xf]
      %v714 = vpack.c.bf16 %v706, %v704
      %v715 = vpack.c.bf16 %v707, %v705
      %v716 = vpack.c.bf16 %v710, %v708
      %v717 = vpack.c.bf16 %v711, %v709
      %v718 = vld [vmem:[%s5] sm:$0xff]
      %v719 = vld [vmem:[%s5 + $0x8] sm:$0xff]
      %721 = vset.pattern.permute.xlu0 0
      %722 = vperm.xlu0 %721, %v718
      %v723 = vpop.permute.xlu0 %722
      %726 = vset.pattern.permute.xlu0 0
      %727 = vperm.xlu0 %726, %v719
      %v728 = vpop.permute.xlu0 %727
      %v732 = vunpack.c.l.b16 %v712
      %v733 = vunpack.c.l.b16 %v713
      %v734 = vpack.c.b16 %v733, %v732
      %vm735 = vcmask 261120
      %v737 = vsel %vm735, %v734, 0
      %739 = vmatprep.subr.bf16.mxu0 %v715
      %740 = vmatpush1.bf16.msra.mxu0 %v714
      %741 = vmatprep.subr.bf16.mxu0 %v717
      %742 = vmatpush1.bf16.msra.mxu0 %v716
      %743 = vmatprep.subr.bf16.mxu0 0
      %744 = vmatpush1.bf16.msra.mxu0 0
      %745 = vmatprep.subr.bf16.mxu0 0
      %746 = vmatpush1.bf16.msra.mxu0 0
      %747 = vmatprep.subr.bf16.mxu0 0
      %748 = vmatpush1.bf16.msra.mxu0 0
      %749 = vmatprep.subr.bf16.mxu0 0
      %750 = vmatpush1.bf16.msra.mxu0 0
      %751 = vmatprep.subr.bf16.mxu0 0
      %752 = vmatpush1.bf16.msra.mxu0 0
      %753 = vmatprep.subr.bf16.mxu0 0
      %754 = vmatpush1.bf16.msra.mxu0 0
      %755 = vmatprep.subr.bf16.mxu0 0
      %756 = vmatpush1.bf16.msra.mxu0 0
      %757 = vmatprep.subr.bf16.mxu0 0
      %758 = vmatpush1.bf16.msra.mxu0 0
      %759 = vmatprep.subr.bf16.mxu0 0
      %760 = vmatpush1.bf16.msra.mxu0 0
      %761 = vmatprep.subr.bf16.mxu0 0
      %762 = vmatpush1.bf16.msra.mxu0 0
      %763 = vmatprep.subr.bf16.mxu0 0
      %764 = vmatpush1.bf16.msra.mxu0 0
      %765 = vmatprep.subr.bf16.mxu0 0
      %766 = vmatpush1.bf16.msra.mxu0 0
      %767 = vmatprep.subr.bf16.mxu0 0
      %768 = vmatpush1.bf16.msra.mxu0 0
      %769 = vmatprep.subr.bf16.mxu0 0
      %770 = vmatpush1.bf16.msra.mxu0 0
      %771 = vmatprep.mubr.bf16.mxu0 0
      %772 = vmatmul.mubr.bf16.gmra.mrb[0].mxu0 %v737
      %v773 = vpop.f32.mrb[0].mxu0
      %v774 = vadd.f32 %v723, %v773
      %v775 = vpop.f32.mrb[0].mxu0
      %v776 = vadd.f32 %v723, %v775
      %v777 = vpop.f32.mrb[0].mxu0
      %v778 = vadd.f32 %v728, %v777
      %v779 = vpop.f32.mrb[0].mxu0
      %v780 = vadd.f32 %v728, %v779
      %781 = vdwg.mxu0
      %v782 = vmax.f32 %v774, %v778
      %v783 = vrot.slane %v782, 4
      %v784 = vmax.f32 %v782, %v783
      %v785 = vrot.slane %v784, 2
      %v786 = vmax.f32 %v784, %v785
      %v787 = vrot.slane %v786, 1
      %v788 = vmax.f32 %v786, %v787
      %v789 = vmax.f32 %v776, %v780
      %v790 = vrot.slane %v789, 4
      %v791 = vmax.f32 %v789, %v790
      %v792 = vrot.slane %v791, 2
      %v793 = vmax.f32 %v791, %v792
      %v794 = vrot.slane %v793, 1
      %v795 = vmax.f32 %v793, %v794
      %v796 = vsub.f32 %v774, %v788
      %v797 = vsub.f32 %v776, %v795
      %v798 = vsub.f32 %v778, %v788
      %v799 = vsub.f32 %v780, %v795
      %v800 = vmul.f32 %v796, 1.442695
      %v801 = vpow.pop %v800
      %v802 = vmul.f32 %v797, 1.442695
      %v803 = vpow.pop %v802
      %v804 = vmul.f32 %v798, 1.442695
      %v805 = vpow.pop %v804
      %v806 = vmul.f32 %v799, 1.442695
      %v807 = vpow.pop %v806
      %v808 = vld [vmem:[%s6] sm:$0xff]
      %v809 = vld [vmem:[%s6 + $0x8] sm:$0xff]
      %811 = vset.pattern.permute.xlu0 0
      %812 = vperm.xlu0 %811, %v808
      %v813 = vpop.permute.xlu0 %812
      %816 = vset.pattern.permute.xlu0 0
      %817 = vperm.xlu0 %816, %v809
      %v818 = vpop.permute.xlu0 %817
      %v820 = vmul.f32 %v801, %v813
      %v821 = vmul.f32 %v803, %v813
      %v822 = vmul.f32 %v805, %v818
      %v823 = vmul.f32 %v807, %v818
      %v824 = vadd.f32 %v820, %v822
      %v825 = vrot.slane %v824, 4
      %v826 = vadd.f32 %v824, %v825
      %v827 = vrot.slane %v826, 2
      %v828 = vadd.f32 %v826, %v827
      %v829 = vrot.slane %v828, 1
      %v830 = vadd.f32 %v828, %v829
      %v831 = vadd.f32 %v821, %v823
      %v832 = vrot.slane %v831, 4
      %v833 = vadd.f32 %v831, %v832
      %v834 = vrot.slane %v833, 2
      %v835 = vadd.f32 %v833, %v834
      %v836 = vrot.slane %v835, 1
      %v837 = vadd.f32 %v835, %v836
      %v838 = vadd.f32 %v801, %v805
      %v839 = vrot.slane %v838, 4
      %v840 = vadd.f32 %v838, %v839
      %v841 = vrot.slane %v840, 2
      %v842 = vadd.f32 %v840, %v841
      %v843 = vrot.slane %v842, 1
      %v844 = vadd.f32 %v842, %v843
      %v845 = vadd.f32 %v803, %v807
      %v846 = vrot.slane %v845, 4
      %v847 = vadd.f32 %v845, %v846
      %v848 = vrot.slane %v847, 2
      %v849 = vadd.f32 %v847, %v848
      %v850 = vrot.slane %v849, 1
      %v851 = vadd.f32 %v849, %v850
      %v852 = vrcp.pop %v844
      %v853 = vrcp.pop %v851
      %v854 = vmul.f32 %v830, %v852
      %v855 = vmul.f32 %v837, %v853
      %s856 = sld [smem:[#allocation2]]
      %v857 = vstv %s856
      %v858 = vadd.f32 %v854, %v857
      %v859 = vadd.f32 %v855, %v857
      %v860 = vxor.u32 %v858, 2147483648
      %v861 = vxor.u32 %v859, 2147483648
      %v862 = vmul.f32 %v860, 1.442695
      %v863 = vpow.pop %v862
      %v864 = vmul.f32 %v861, 1.442695
      %v865 = vpow.pop %v864
      %v866 = vadd.f32 %v863, 1.0
      %v867 = vadd.f32 %v865, 1.0
      %v868 = vrcp.pop %v866
      %v869 = vmul.f32 1.0, %v868
      %v870 = vrcp.pop %v867
      %v871 = vmul.f32 1.0, %v870
      %v874 = vcombine.low %v869, %v871
      %v876 = vunpack.c.l.s4 1966171168
      %v877 = vunpack.c.0.s8 %v876
      %v878 = vlaneseq
      %v879 = vshrl.u32 %v878, 7
      %v880 = vsub.s32 %v877, %v879
      %v881 = vrot.slane %v874, %v880
      %v883 = vunpack.c.l.s4 1966171168
      %v884 = vunpack.c.0.s8 %v883
      %v885 = vlaneseq
      %v886 = vshrl.u32 %v885, 7
      %v887 = vsub.s32 %v884, %v886
      %v888 = vrot.slane %v881, %v887
      %v890 = vlaneseq
      %vm891 = vcmp.ge.s32.totalorder %v890, 0
      %vm892 = vcmp.lt.s32.totalorder %v890, 256
      %vm893 = vmand %vm891, %vm892
      %894 = vst.msk [vmem:[%s306] sm:$0x3] %vm893, %v888
      %s895 = smul.u32 2, %s20
      %p896 = scmp.lt.s32.totalorder %s895, 3
      %s897 = scalar_select %p896, %s895, 3
      %s898 = scalar_lea.vmem %s8, %s897
      // Predicated region
      $region53: #{_lambda_.1} parent=51 // pred_check
        %p899 = pneg %p211
      $region54: #{_lambda_.1} parent=51 // pred_check_branch
        %901 = sbr.rel (%p899) target = $region56
      $region55: #{_lambda_.1} parent=51 // pred_region
        %s902 = smul.u32 2, %s20
      $region56: #{_lambda_.1} parent=51 // pred_fallthru
        _
    $region52: #{_lambda_.1} parent=5 // pred_fallthru
      _
    %p903 = scmp.le.s32.totalorder 2, %s15
    // Predicated region
    $region57: #{_lambda_.1} parent=5 // pred_check
      %p904 = pneg %p903
    $region58: #{_lambda_.1} parent=5 // pred_check_branch
      %906 = sbr.rel (%p904) target = $region60
    $region59: #{_lambda_.1} parent=5 // pred_region
      %s907 = ssub.s32 %s15, 2
      // Predicated region
      $region61: #{_lambda_.1} parent=59 // pred_check
        %p908 = pneg %p217
      $region62: #{_lambda_.1} parent=59 // pred_check_branch
        %910 = sbr.rel (%p908) target = $region64
      $region63: #{_lambda_.1} parent=59 // pred_region
        %s911 = smul.u32 2, %s21
        %p912 = scmp.lt.s32.totalorder %s911, 3
        %s913 = scalar_select %p912, %s911, 3
        %s914 = scalar_lea.vmem %s8, %s913
      $region64: #{_lambda_.1} parent=59 // pred_fallthru
        _
    $region60: #{_lambda_.1} parent=5 // pred_fallthru
      _
  $region6: #{_lambda_.1} parent=0 // loop_footer
    %s19 = sadd.s32 1, %s15
  $region7: #{_lambda_.1} parent=0 // loop_footer_branch
    %14 = sbr.rel target = $region3
  $region8: #{_lambda_.1} parent=0 // loop_exit
    _

</llo_original>
